<compile_context>
chip_gen: v7x
topology: tpu7x:2x2x1
jax: 0.10.0
libtpu: 0.0.40
codegen_flags: <defaults>
</compile_context>

<pallas_src>
import functools
import math

import jax
import jax.numpy as jnp
from jax import lax
from jax.experimental import pallas as pl
from jax.experimental.pallas import tpu as pltpu


def _embed_onehot_kernel(idx_ref, tab_ref, o_ref, *, scale, vocab, ncomp):
    """Block-vectorized gather: one-hot(ids) @ table on the MXU, scale fused into the store.

    idx_ref : VMEM (1, TOK, 1) int32     -- this block's token ids (sublane-major)
    tab_ref : VMEM (ncomp, vocab, D) bf16 -- resident table, split into hi/lo bf16 components
    o_ref   : VMEM (TOK, D)              -- output tile for this token block
    """
    ids = idx_ref[0]                                   # (TOK, 1)
    # Clamp: VMEM/MXU paths have no bounds check; PyTorch would raise on OOB ids.
    ids = jnp.clip(ids, 0, vocab - 1)
    tok = ids.shape[0]

    lanes = lax.broadcasted_iota(jnp.int32, (tok, vocab), 1)
    onehot = (ids == lanes).astype(jnp.bfloat16)       # (TOK, vocab); 0/1 exact in bf16

    acc = jnp.dot(onehot, tab_ref[0], preferred_element_type=jnp.float32)
    for c in range(1, ncomp):                          # static unroll (ncomp <= 2)
        acc = acc + jnp.dot(onehot, tab_ref[c], preferred_element_type=jnp.float32)

    # Fused sqrt(d_model) scale -> single store, no second pass over the tile.
    o_ref[...] = (acc * scale).astype(o_ref.dtype)


def _pick_token_block(n, cap=512):
    """Largest multiple-of-8 divisor of n up to cap (no padding); else round n up to 8."""
    best = 0
    t = 8
    while t <= min(cap, n):
        if n % t == 0:
            best = t
        t += 8
    if best:
        return best
    return min(cap, ((n + 7) // 8) * 8)


def embeddings_forward(x, table, *, max_tok=512):
    """x: [B, S] integer token ids; table: [vocab, d_model]. Returns [B, S, d_model]."""
    B, S = x.shape
    vocab, D = table.shape
    N = B * S
    scale = float(math.sqrt(D))

    tok = _pick_token_block(N, max_tok)
    n_blocks = pl.cdiv(N, tok)
    n_pad = n_blocks * tok

    idx = x.reshape(N).astype(jnp.int32)
    if n_pad != N:
        # Padded ids gather row 0; those rows are sliced off below.
        idx = jnp.pad(idx, (0, n_pad - N))
    ids3 = idx.reshape(n_blocks, tok, 1)

    # Host-side (one-time) split of the f32 table into hi/lo bf16 components so the in-kernel
    # gather uses the native bf16 MXU path while staying ~f32-accurate.
    if table.dtype == jnp.float32:
        hi = table.astype(jnp.bfloat16)
        lo = (table - hi.astype(jnp.float32)).astype(jnp.bfloat16)
        tab_stack = jnp.stack([hi, lo])                      # (2, vocab, D) bf16
    else:
        tab_stack = table.astype(jnp.bfloat16)[None]         # (1, vocab, D) bf16
    ncomp = int(tab_stack.shape[0])

    # Per-generation VMEM budget (v5e/v6e: 128 MiB, v7x: 64 MiB per TC).
    try:
        phys_vmem = int(pltpu.get_tpu_info().vmem_capacity_bytes)
    except Exception:
        phys_vmem = 64 * 1024 * 1024
    budget = int(phys_vmem * 0.8)

    out_itemsize = jnp.dtype(table.dtype).itemsize
    tab_bytes = ncomp * vocab * D * 2                    # bf16 components
    vmem_needed = (2 * tab_bytes                         # worst case: double-buffered fallback
                   + 2 * tok * D * out_itemsize          # double-buffered output tile
                   + 2 * tok * 4                         # double-buffered id block
                   + tok * vocab * 2                     # one-hot intermediate
                   + (2 << 20))                          # slack
    if vmem_needed > budget:
        # TODO(synk): add an HBM DMA-gather path (table in pl.ANY + grouped
        # pltpu.make_async_copy row fetches) for tables that exceed the per-core VMEM budget
        # (mandatory for large vocab on v7x); the resident-table path below assumes fit.
        raise NotImplementedError("embedding table too large for the VMEM-resident path")
    vmem_limit = int(min(max(vmem_needed, 16 * 1024 * 1024), budget))

    kernel = functools.partial(_embed_onehot_kernel, scale=scale, vocab=vocab, ncomp=ncomp)

    def _call(single_buffer_table):
        if single_buffer_table:
            # Constant index_map -> no double buffer needed; halves the table's VMEM footprint.
            tab_spec = pl.BlockSpec((ncomp, vocab, D), lambda i: (0, 0, 0),
                                    pipeline_mode=pl.Buffered(1))
        else:
            tab_spec = pl.BlockSpec((ncomp, vocab, D), lambda i: (0, 0, 0))
        return pl.pallas_call(
            kernel,
            out_shape=jax.ShapeDtypeStruct((n_pad, D), table.dtype),
            grid=(n_blocks,),
            in_specs=[
                pl.BlockSpec((1, tok, 1), lambda i: (i, 0, 0)),   # per-block token ids
                tab_spec,                                          # resident table
            ],
            out_specs=pl.BlockSpec((tok, D), lambda i: (i, 0)),
            compiler_params=pltpu.CompilerParams(
                dimension_semantics=("parallel",),
                vmem_limit_bytes=vmem_limit,
            ),
        )(ids3, tab_stack)

    try:
        out = _call(True)
    except Exception:
        # Older JAX without pipeline_mode / Buffered(1): fall back to default buffering.
        out = _call(False)

    if n_pad != N:
        out = out[:N]
    return out.reshape(B, S, D)


if __name__ == "__main__":
    key = jax.random.PRNGKey(0)
    k_tab, k_idx = jax.random.split(key)

    vocab = 16
    d_model = 32
    batch, seq = 2, 8

    # Deterministic parameter init (nn.Embedding default N(0,1); padding_idx=1 row zeroed).
    table = jax.random.normal(k_tab, (vocab, d_model), dtype=jnp.float32)
    table = table.at[1].set(0.0)

    # Token ids, include some padding tokens (id == 1).
    x = jax.random.randint(k_idx, (batch, seq), 0, vocab, dtype=jnp.int32)
    x = x.at[0, 0].set(1)
    x = x.at[1, 3].set(1)

    out = embeddings_forward(x, table)
    out = jax.block_until_ready(out)

    # Reference: pure-JAX equivalent of the PyTorch forward.
    ref = table[x] * math.sqrt(d_model)

    assert out.shape == (batch, seq, d_model)
    assert out.dtype == jnp.float32
    assert jnp.allclose(out, ref, atol=1e-5, rtol=1e-4), float(jnp.max(jnp.abs(out - ref)))
    # Padding rows must be exactly zero.
    assert jnp.all(out[0, 0] == 0.0) and jnp.all(out[1, 3] == 0.0)

    print("KERNEL_OK")
</pallas_src>

<mosaic_0001>
module attributes {stable_mosaic.version = 11 : i64} {
  func.func @_embed_onehot_kernel(%arg0: i32, %arg1: memref<1x16x1xi32, #tpu.memory_space<vmem>>, %arg2: memref<2x16x32xbf16, #tpu.memory_space<vmem>>, %arg3: memref<16x32xf32, #tpu.memory_space<vmem>>) attributes {dimension_semantics = [#tpu.dimension_semantics<parallel>], iteration_bounds = array<i64: 1>, scalar_prefetch = 0 : i64, scratch_operands = 0 : i64, tpu.core_type = #tpu.core_type<tc>, window_params = [{transform_indices = @transform_0, window_bounds = array<i64: 1, 16, 1>}, {pipeline_mode = #tpu.pipeline_mode<synchronous>, transform_indices = @transform_1, window_bounds = array<i64: 2, 16, 32>}, {transform_indices = @transform_2, window_bounds = array<i64: 16, 32>}]} {
    %c0 = arith.constant 0 : index
    %c0_0 = arith.constant 0 : index
    %c0_1 = arith.constant 0 : index
    %0 = vector.load %arg1[%c0, %c0_0, %c0_1] : memref<1x16x1xi32, #tpu.memory_space<vmem>>, vector<1x16x1xi32>
    %1 = vector.shape_cast %0 : vector<1x16x1xi32> to vector<16x1xi32>
    %c0_i32 = arith.constant 0 : i32
    %c15_i32 = arith.constant 15 : i32
    %2 = vector.broadcast %c0_i32 : i32 to vector<16x1xi32>
    %3 = arith.maxsi %2, %1 : vector<16x1xi32>
    %4 = vector.broadcast %c15_i32 : i32 to vector<16x1xi32>
    %5 = arith.minsi %4, %3 : vector<16x1xi32>
    %6 = tpu.iota {dimensions = array<i32: 1>} : vector<16x16xi32>
    %7 = vector.broadcast %5 : vector<16x1xi32> to vector<16x16xi32>
    %8 = arith.cmpi eq, %7, %6 : vector<16x16xi32>
    %9 = arith.extui %8 : vector<16x16xi1> to vector<16x16xi32>
    %10 = arith.sitofp %9 : vector<16x16xi32> to vector<16x16xf32>
    %11 = arith.truncf %10 : vector<16x16xf32> to vector<16x16xbf16>
    %c0_2 = arith.constant 0 : index
    %c0_3 = arith.constant 0 : index
    %c0_4 = arith.constant 0 : index
    %12 = vector.load %arg2[%c0_2, %c0_3, %c0_4] : memref<2x16x32xbf16, #tpu.memory_space<vmem>>, vector<1x16x32xbf16>
    %13 = vector.shape_cast %12 : vector<1x16x32xbf16> to vector<16x32xbf16>
    %cst = arith.constant dense<0.000000e+00> : vector<16x32xf32>
    %14 = tpu.matmul %11, %13, %cst {dimension_numbers = #tpu.dot_dimension_numbers<[1], [0], [0], [1], [0, 0, 1, 1], [], []>} : vector<16x16xbf16>, vector<16x32xbf16>, vector<16x32xf32> -> vector<16x32xf32>
    %c1 = arith.constant 1 : index
    %c0_5 = arith.constant 0 : index
    %c0_6 = arith.constant 0 : index
    %15 = vector.load %arg2[%c1, %c0_5, %c0_6] : memref<2x16x32xbf16, #tpu.memory_space<vmem>>, vector<1x16x32xbf16>
    %16 = vector.shape_cast %15 : vector<1x16x32xbf16> to vector<16x32xbf16>
    %cst_7 = arith.constant dense<0.000000e+00> : vector<16x32xf32>
    %17 = tpu.matmul %11, %16, %cst_7 {dimension_numbers = #tpu.dot_dimension_numbers<[1], [0], [0], [1], [0, 0, 1, 1], [], []>} : vector<16x16xbf16>, vector<16x32xbf16>, vector<16x32xf32> -> vector<16x32xf32>
    %18 = arith.addf %14, %17 : vector<16x32xf32>
    %cst_8 = arith.constant 5.65685415 : f32
    %19 = vector.broadcast %cst_8 : f32 to vector<16x32xf32>
    %20 = arith.mulf %18, %19 : vector<16x32xf32>
    %c0_9 = arith.constant 0 : index
    %c0_10 = arith.constant 0 : index
    %21 = vector.load %arg3[%c0_9, %c0_10] : memref<16x32xf32, #tpu.memory_space<vmem>>, vector<16x32xf32>
    tpu.vector_store %arg3[%c0_9, %c0_10], %20 {strides = array<i32>} : memref<16x32xf32, #tpu.memory_space<vmem>>, vector<16x32xf32>,
    return
  }
  func.func @transform_0(%arg0: i32) -> (i32, i32, i32) {
    %c0_i32 = arith.constant 0 : i32
    %c0_i32_0 = arith.constant 0 : i32
    %c0_i32_1 = arith.constant 0 : i32
    return %arg0, %c0_i32, %c0_i32_0 : i32, i32, i32
  }
  func.func @transform_1(%arg0: i32) -> (i32, i32, i32) {
    %c0_i32 = arith.constant 0 : i32
    %c0_i32_0 = arith.constant 0 : i32
    %c0_i32_1 = arith.constant 0 : i32
    %c0_i32_2 = arith.constant 0 : i32
    return %c0_i32, %c0_i32_0, %c0_i32_1 : i32, i32, i32
  }
  func.func @transform_2(%arg0: i32) -> (i32, i32) {
    %c0_i32 = arith.constant 0 : i32
    %c0_i32_0 = arith.constant 0 : i32
    return %arg0, %c0_i32 : i32, i32
  }
}

module attributes {stable_mosaic.version = 11 : i64} {
  func.func @_embed_onehot_kernel(%arg0: i32, %arg1: memref<1x16x1xi32, #tpu.memory_space<vmem>>, %arg2: memref<2x16x32xbf16, #tpu.memory_space<vmem>>, %arg3: memref<16x32xf32, #tpu.memory_space<vmem>>) attributes {dimension_semantics = [#tpu.dimension_semantics<parallel>], iteration_bounds = array<i64: 1>, scalar_prefetch = 0 : i64, scratch_operands = 0 : i64, tpu.core_type = #tpu.core_type<tc>, window_params = [{transform_indices = @transform_0, window_bounds = array<i64: 1, 16, 1>}, {pipeline_mode = #tpu.pipeline_mode<synchronous>, transform_indices = @transform_1, window_bounds = array<i64: 2, 16, 32>}, {transform_indices = @transform_2, window_bounds = array<i64: 16, 32>}]} {
    %c0 = arith.constant 0 : index
    %c0_0 = arith.constant 0 : index
    %c0_1 = arith.constant 0 : index
    %0 = vector.load %arg1[%c0, %c0_0, %c0_1] : memref<1x16x1xi32, #tpu.memory_space<vmem>>, vector<1x16x1xi32>
    %1 = vector.shape_cast %0 : vector<1x16x1xi32> to vector<16x1xi32>
    %c0_i32 = arith.constant 0 : i32
    %c15_i32 = arith.constant 15 : i32
    %2 = vector.broadcast %c0_i32 : i32 to vector<16x1xi32>
    %3 = arith.maxsi %2, %1 : vector<16x1xi32>
    %4 = vector.broadcast %c15_i32 : i32 to vector<16x1xi32>
    %5 = arith.minsi %4, %3 : vector<16x1xi32>
    %6 = tpu.iota {dimensions = array<i32: 1>} : vector<16x16xi32>
    %7 = vector.broadcast %5 : vector<16x1xi32> to vector<16x16xi32>
    %8 = arith.cmpi eq, %7, %6 : vector<16x16xi32>
    %9 = arith.extui %8 : vector<16x16xi1> to vector<16x16xi32>
    %10 = arith.sitofp %9 : vector<16x16xi32> to vector<16x16xf32>
    %11 = arith.truncf %10 : vector<16x16xf32> to vector<16x16xbf16>
    %c0_2 = arith.constant 0 : index
    %c0_3 = arith.constant 0 : index
    %c0_4 = arith.constant 0 : index
    %12 = vector.load %arg2[%c0_2, %c0_3, %c0_4] : memref<2x16x32xbf16, #tpu.memory_space<vmem>>, vector<1x16x32xbf16>
    %13 = vector.shape_cast %12 : vector<1x16x32xbf16> to vector<16x32xbf16>
    %cst = arith.constant dense<0.000000e+00> : vector<16x32xf32>
    %14 = tpu.matmul %11, %13, %cst {dimension_numbers = #tpu.dot_dimension_numbers<[1], [0], [0], [1], [0, 0, 1, 1], [], []>} : vector<16x16xbf16>, vector<16x32xbf16>, vector<16x32xf32> -> vector<16x32xf32>
    %c1 = arith.constant 1 : index
    %c0_5 = arith.constant 0 : index
    %c0_6 = arith.constant 0 : index
    %15 = vector.load %arg2[%c1, %c0_5, %c0_6] : memref<2x16x32xbf16, #tpu.memory_space<vmem>>, vector<1x16x32xbf16>
    %16 = vector.shape_cast %15 : vector<1x16x32xbf16> to vector<16x32xbf16>
    %cst_7 = arith.constant dense<0.000000e+00> : vector<16x32xf32>
    %17 = tpu.matmul %11, %16, %cst_7 {dimension_numbers = #tpu.dot_dimension_numbers<[1], [0], [0], [1], [0, 0, 1, 1], [], []>} : vector<16x16xbf16>, vector<16x32xbf16>, vector<16x32xf32> -> vector<16x32xf32>
    %18 = arith.addf %14, %17 : vector<16x32xf32>
    %cst_8 = arith.constant 5.65685415 : f32
    %19 = vector.broadcast %cst_8 : f32 to vector<16x32xf32>
    %20 = arith.mulf %18, %19 : vector<16x32xf32>
    %c0_9 = arith.constant 0 : index
    %c0_10 = arith.constant 0 : index
    %21 = vector.load %arg3[%c0_9, %c0_10] : memref<16x32xf32, #tpu.memory_space<vmem>>, vector<16x32xf32>
    tpu.vector_store %arg3[%c0_9, %c0_10], %20 {strides = array<i32>} : memref<16x32xf32, #tpu.memory_space<vmem>>, vector<16x32xf32>,
    return
  }
  func.func @transform_0(%arg0: i32) -> (i32, i32, i32) {
    %c0_i32 = arith.constant 0 : i32
    %c0_i32_0 = arith.constant 0 : i32
    %c0_i32_1 = arith.constant 0 : i32
    return %arg0, %c0_i32, %c0_i32_0 : i32, i32, i32
  }
  func.func @transform_1(%arg0: i32) -> (i32, i32, i32) {
    %c0_i32 = arith.constant 0 : i32
    %c0_i32_0 = arith.constant 0 : i32
    %c0_i32_1 = arith.constant 0 : i32
    %c0_i32_2 = arith.constant 0 : i32
    return %c0_i32, %c0_i32_0, %c0_i32_1 : i32, i32, i32
  }
  func.func @transform_2(%arg0: i32) -> (i32, i32) {
    %c0_i32 = arith.constant 0 : i32
    %c0_i32_0 = arith.constant 0 : i32
    return %arg0, %c0_i32 : i32, i32
  }
}

</mosaic_0001>

<llo_original>
// kernel: tpu_custom_call.1
$region0: #{tpu_custom_call.1}
  #allocation0 [shape = 'u32[]', space=smem, size = 0x4, offset = 0x4, fixed_abs, tag = 'smem constant byte address 0x4 - core index']
  #allocation1 [shape = 'u32[144,128]{1,0:T(1,128)}', space=vmem, size = 0x12000, scoped, tag = 'internal scratch']
  %s0 = inlined_call_operand.vmem [shape: s32[1,16,1], index: 0, kind: input, shape index: {}]
  %s1 = inlined_call_operand.vmem [shape: bf16[2,16,32], index: 1, kind: input, shape index: {}]
  %s2 = inlined_call_operand.hbm [shape: f32[16,32], index: 2, kind: output, shape index: {}]
  %s3 = sld [smem:[#allocation0]]
  $region18: #{tpu_custom_call.1} parent=0
    _
  %s5 = ssub.s32 1, %s3
  %s6 = scalar_select 0, %s5, %s3
  $region1: #{tpu_custom_call.1} parent=0
    #allocation2 [shape = 'u8[8192]{0}', space=vmem, size = 0x2000, scoped, tag = 'output window, operand 0, single buffered']
    #allocation3 [shape = 's32[1]{0}', space=sflag, size = 0x4, scoped, tag = 'scoped memory for tpu_custom_call.1']
    %7 = vsyncpa [#allocation3], 0
    // Predicated region
    $region2: #{tpu_custom_call.1} parent=1 // pred_check
      _
    $region3: #{tpu_custom_call.1} parent=1 // pred_check_branch
      %9 = sbr.rel (0) target = $region5
    $region4: #{tpu_custom_call.1} parent=1 // pred_region
      _
    $region5: #{tpu_custom_call.1} parent=1 // pred_fallthru
      _
    // Predicated region
    $region6: #{tpu_custom_call.1} parent=1 // pred_check
      _
    $region7: #{tpu_custom_call.1} parent=1 // pred_check_branch
      %11 = sbr.rel (0) target = $region9
    $region8: #{tpu_custom_call.1} parent=1 // pred_region
      _
    $region9: #{tpu_custom_call.1} parent=1 // pred_fallthru
      _
    %v13 = vld [vmem:[%s0] sm:$0xff]
    %v14 = vld [vmem:[%s0 + $0x8] sm:$0xff]
    %vm15 = vcmp.gt.s32.totalorder %v13, 0
    %v16 = vsel %vm15, %v13, 0
    %vm17 = vcmp.gt.s32.totalorder %v14, 0
    %v18 = vsel %vm17, %v14, 0
    %vm19 = vcmp.lt.s32.totalorder %v16, 15
    %v20 = vsel %vm19, %v16, 15
    %vm21 = vcmp.lt.s32.totalorder %v18, 15
    %v22 = vsel %vm21, %v18, 15
    %v23 = vlaneseq
    %v24 = vand.u32 %v23, 127
    %25 = vset.pattern.permute.xlu0 0
    %26 = vperm.xlu0 %25, %v20
    %v27 = vpop.permute.xlu0 %26
    %28 = vset.pattern.permute.xlu0 0
    %29 = vperm.xlu0 %28, %v22
    %v30 = vpop.permute.xlu0 %29
    %vm31 = vcmp.eq.s32.totalorder %v27, %v24
    %vm32 = vcmp.eq.s32.totalorder %v30, %v24
    %v33 = vsel %vm31, 1, 0
    %v34 = vsel %vm32, 1, 0
    %v35 = vcvt.s32.f32 %v33
    %v36 = vcvt.s32.f32 %v34
    %v37 = vpack.c.bf16 %v36, %v35
    %v38 = vld [vmem:[%s1] sm:$0xf]
    %v39 = vld [vmem:[%s1 + $0x4] sm:$0xf]
    %s40 = scalar_lea.vmem %s1, 8
    %v41 = vld [vmem:[%s40] sm:$0xf]
    %v42 = vld [vmem:[%s40 + $0x4] sm:$0xf]
    %v45 = vunpack.c.l.b16 %v41
    %v46 = vunpack.c.l.b16 %v42
    %v47 = vpack.c.b16 %v46, %v45
    %vm49 = vcmask 130048
    %v51 = vsel %vm49, %v37, 0
    %53 = vmatprep.subr.bf16.mxu0 0
    %54 = vmatpush1.bf16.msra.mxu0 %v47
    %55 = vmatprep.subr.bf16.mxu0 0
    %56 = vmatpush1.bf16.msra.mxu0 0
    %57 = vmatprep.subr.bf16.mxu0 0
    %58 = vmatpush1.bf16.msra.mxu0 0
    %59 = vmatprep.subr.bf16.mxu0 0
    %60 = vmatpush1.bf16.msra.mxu0 0
    %61 = vmatprep.subr.bf16.mxu0 0
    %62 = vmatpush1.bf16.msra.mxu0 0
    %63 = vmatprep.subr.bf16.mxu0 0
    %64 = vmatpush1.bf16.msra.mxu0 0
    %65 = vmatprep.subr.bf16.mxu0 0
    %66 = vmatpush1.bf16.msra.mxu0 0
    %67 = vmatprep.subr.bf16.mxu0 0
    %68 = vmatpush1.bf16.msra.mxu0 0
    %69 = vmatprep.subr.bf16.mxu0 0
    %70 = vmatpush1.bf16.msra.mxu0 0
    %71 = vmatprep.subr.bf16.mxu0 0
    %72 = vmatpush1.bf16.msra.mxu0 0
    %73 = vmatprep.subr.bf16.mxu0 0
    %74 = vmatpush1.bf16.msra.mxu0 0
    %75 = vmatprep.subr.bf16.mxu0 0
    %76 = vmatpush1.bf16.msra.mxu0 0
    %77 = vmatprep.subr.bf16.mxu0 0
    %78 = vmatpush1.bf16.msra.mxu0 0
    %79 = vmatprep.subr.bf16.mxu0 0
    %80 = vmatpush1.bf16.msra.mxu0 0
    %81 = vmatprep.subr.bf16.mxu0 0
    %82 = vmatpush1.bf16.msra.mxu0 0
    %83 = vmatprep.subr.bf16.mxu0 0
    %84 = vmatpush1.bf16.msra.mxu0 0
    %85 = vmatprep.mubr.bf16.mxu0 0
    %86 = vmatmul.mubr.bf16.gmra.mrb[0].mxu0 %v51
    %v87 = vpop.f32.mrb[0].mxu0
    %v88 = vadd.f32 0.0, %v87
    %v89 = vpop.f32.mrb[0].mxu0
    %v90 = vpop.f32.mrb[0].mxu0
    %v91 = vadd.f32 0.0, %v90
    %v92 = vpop.f32.mrb[0].mxu0
    %93 = vdwg.mxu0
    %v96 = vunpack.c.l.b16 %v38
    %v97 = vunpack.c.l.b16 %v39
    %v98 = vpack.c.b16 %v97, %v96
    %100 = vmatprep.subr.bf16.mxu0 0
    %101 = vmatpush1.bf16.msra.mxu0 %v98
    %102 = vmatprep.subr.bf16.mxu0 0
    %103 = vmatpush1.bf16.msra.mxu0 0
    %104 = vmatprep.subr.bf16.mxu0 0
    %105 = vmatpush1.bf16.msra.mxu0 0
    %106 = vmatprep.subr.bf16.mxu0 0
    %107 = vmatpush1.bf16.msra.mxu0 0
    %108 = vmatprep.subr.bf16.mxu0 0
    %109 = vmatpush1.bf16.msra.mxu0 0
    %110 = vmatprep.subr.bf16.mxu0 0
    %111 = vmatpush1.bf16.msra.mxu0 0
    %112 = vmatprep.subr.bf16.mxu0 0
    %113 = vmatpush1.bf16.msra.mxu0 0
    %114 = vmatprep.subr.bf16.mxu0 0
    %115 = vmatpush1.bf16.msra.mxu0 0
    %116 = vmatprep.subr.bf16.mxu0 0
    %117 = vmatpush1.bf16.msra.mxu0 0
    %118 = vmatprep.subr.bf16.mxu0 0
    %119 = vmatpush1.bf16.msra.mxu0 0
    %120 = vmatprep.subr.bf16.mxu0 0
    %121 = vmatpush1.bf16.msra.mxu0 0
    %122 = vmatprep.subr.bf16.mxu0 0
    %123 = vmatpush1.bf16.msra.mxu0 0
    %124 = vmatprep.subr.bf16.mxu0 0
    %125 = vmatpush1.bf16.msra.mxu0 0
    %126 = vmatprep.subr.bf16.mxu0 0
    %127 = vmatpush1.bf16.msra.mxu0 0
    %128 = vmatprep.subr.bf16.mxu0 0
    %129 = vmatpush1.bf16.msra.mxu0 0
    %130 = vmatprep.subr.bf16.mxu0 0
    %131 = vmatpush1.bf16.msra.mxu0 0
    %132 = vmatprep.mubr.bf16.mxu0 0
    %133 = vmatmul.mubr.bf16.gmra.mrb[0].mxu0 %v51
    %v134 = vpop.f32.mrb[0].mxu0
    %v135 = vadd.f32 %v88, %v134
    %v136 = vpop.f32.mrb[0].mxu0
    %v137 = vpop.f32.mrb[0].mxu0
    %v138 = vadd.f32 %v91, %v137
    %v139 = vpop.f32.mrb[0].mxu0
    %140 = vdwg.mxu0
    %v141 = vmul.f32 %v135, 5.656854
    %v142 = vmul.f32 %v138, 5.656854
    %vm143 = vcmask 261120
    %144 = vst.msk [vmem:[#allocation2] sm:$0xff] %vm143, %v141
    %145 = vst.msk [vmem:[#allocation2 + $0x8] sm:$0xff] %vm143, %v142
    // Predicated region
    $region10: #{tpu_custom_call.1} parent=1 // pred_check
      _
    $region11: #{tpu_custom_call.1} parent=1 // pred_check_branch
      %147 = sbr.rel (0) target = $region13
    $region12: #{tpu_custom_call.1} parent=1 // pred_region
      %s149 = ssub.s32 256, 256
      %150 = vsyncadd [#allocation3], %s149
      %s151 = sshll.u32 [#allocation2], 4
      %s152 = int_to_ptr.vmem [resolvable:$true] %s151
      %157 = dma.vmem_to_hbm [thread:$0]  %s152, 256, %s2, [#allocation3], 128, 128, 8
    $region13: #{tpu_custom_call.1} parent=1 // pred_fallthru
      _
    // Predicated region
    $region14: #{tpu_custom_call.1} parent=1 // pred_check
      _
    $region15: #{tpu_custom_call.1} parent=1 // pred_check_branch
      %159 = sbr.rel (0) target = $region17
    $region16: #{tpu_custom_call.1} parent=1 // pred_region
      %160 = dma.done [#allocation3], 256
    $region17: #{tpu_custom_call.1} parent=1 // pred_fallthru
      _
    %161 = vsyncpa [#allocation3], 1

// kernel: tpu_custom_call.1
$region0: #{tpu_custom_call.1}
  #allocation0 [shape = 'u32[]', space=smem, size = 0x4, offset = 0x4, fixed_abs, tag = 'smem constant byte address 0x4 - core index']
  #allocation1 [shape = 'u32[144,128]{1,0:T(1,128)}', space=vmem, size = 0x12000, scoped, tag = 'internal scratch']
  %s0 = inlined_call_operand.vmem [shape: s32[1,16,1], index: 0, kind: input, shape index: {}]
  %s1 = inlined_call_operand.vmem [shape: bf16[2,16,32], index: 1, kind: input, shape index: {}]
  %s2 = inlined_call_operand.hbm [shape: f32[16,32], index: 2, kind: output, shape index: {}]
  %s3 = sld [smem:[#allocation0]]
  $region18: #{tpu_custom_call.1} parent=0
    _
  %s5 = ssub.s32 1, %s3
  %s6 = scalar_select 0, %s5, %s3
  $region1: #{tpu_custom_call.1} parent=0
    #allocation2 [shape = 'u8[8192]{0}', space=vmem, size = 0x2000, scoped, tag = 'output window, operand 0, single buffered']
    #allocation3 [shape = 's32[1]{0}', space=sflag, size = 0x4, scoped, tag = 'scoped memory for tpu_custom_call.1']
    %7 = vsyncpa [#allocation3], 0
    // Predicated region
    $region2: #{tpu_custom_call.1} parent=1 // pred_check
      _
    $region3: #{tpu_custom_call.1} parent=1 // pred_check_branch
      %9 = sbr.rel (0) target = $region5
    $region4: #{tpu_custom_call.1} parent=1 // pred_region
      _
    $region5: #{tpu_custom_call.1} parent=1 // pred_fallthru
      _
    // Predicated region
    $region6: #{tpu_custom_call.1} parent=1 // pred_check
      _
    $region7: #{tpu_custom_call.1} parent=1 // pred_check_branch
      %11 = sbr.rel (0) target = $region9
    $region8: #{tpu_custom_call.1} parent=1 // pred_region
      _
    $region9: #{tpu_custom_call.1} parent=1 // pred_fallthru
      _
    %v13 = vld [vmem:[%s0] sm:$0xff]
    %v14 = vld [vmem:[%s0 + $0x8] sm:$0xff]
    %vm15 = vcmp.gt.s32.totalorder %v13, 0
    %v16 = vsel %vm15, %v13, 0
    %vm17 = vcmp.gt.s32.totalorder %v14, 0
    %v18 = vsel %vm17, %v14, 0
    %vm19 = vcmp.lt.s32.totalorder %v16, 15
    %v20 = vsel %vm19, %v16, 15
    %vm21 = vcmp.lt.s32.totalorder %v18, 15
    %v22 = vsel %vm21, %v18, 15
    %v23 = vlaneseq
    %v24 = vand.u32 %v23, 127
    %25 = vset.pattern.permute.xlu0 0
    %26 = vperm.xlu0 %25, %v20
    %v27 = vpop.permute.xlu0 %26
    %28 = vset.pattern.permute.xlu0 0
    %29 = vperm.xlu0 %28, %v22
    %v30 = vpop.permute.xlu0 %29
    %vm31 = vcmp.eq.s32.totalorder %v27, %v24
    %vm32 = vcmp.eq.s32.totalorder %v30, %v24
    %v33 = vsel %vm31, 1, 0
    %v34 = vsel %vm32, 1, 0
    %v35 = vcvt.s32.f32 %v33
    %v36 = vcvt.s32.f32 %v34
    %v37 = vpack.c.bf16 %v36, %v35
    %v38 = vld [vmem:[%s1] sm:$0xf]
    %v39 = vld [vmem:[%s1 + $0x4] sm:$0xf]
    %s40 = scalar_lea.vmem %s1, 8
    %v41 = vld [vmem:[%s40] sm:$0xf]
    %v42 = vld [vmem:[%s40 + $0x4] sm:$0xf]
    %v45 = vunpack.c.l.b16 %v41
    %v46 = vunpack.c.l.b16 %v42
    %v47 = vpack.c.b16 %v46, %v45
    %vm49 = vcmask 130048
    %v51 = vsel %vm49, %v37, 0
    %53 = vmatprep.subr.bf16.mxu0 0
    %54 = vmatpush1.bf16.msra.mxu0 %v47
    %55 = vmatprep.subr.bf16.mxu0 0
    %56 = vmatpush1.bf16.msra.mxu0 0
    %57 = vmatprep.subr.bf16.mxu0 0
    %58 = vmatpush1.bf16.msra.mxu0 0
    %59 = vmatprep.subr.bf16.mxu0 0
    %60 = vmatpush1.bf16.msra.mxu0 0
    %61 = vmatprep.subr.bf16.mxu0 0
    %62 = vmatpush1.bf16.msra.mxu0 0
    %63 = vmatprep.subr.bf16.mxu0 0
    %64 = vmatpush1.bf16.msra.mxu0 0
    %65 = vmatprep.subr.bf16.mxu0 0
    %66 = vmatpush1.bf16.msra.mxu0 0
    %67 = vmatprep.subr.bf16.mxu0 0
    %68 = vmatpush1.bf16.msra.mxu0 0
    %69 = vmatprep.subr.bf16.mxu0 0
    %70 = vmatpush1.bf16.msra.mxu0 0
    %71 = vmatprep.subr.bf16.mxu0 0
    %72 = vmatpush1.bf16.msra.mxu0 0
    %73 = vmatprep.subr.bf16.mxu0 0
    %74 = vmatpush1.bf16.msra.mxu0 0
    %75 = vmatprep.subr.bf16.mxu0 0
    %76 = vmatpush1.bf16.msra.mxu0 0
    %77 = vmatprep.subr.bf16.mxu0 0
    %78 = vmatpush1.bf16.msra.mxu0 0
    %79 = vmatprep.subr.bf16.mxu0 0
    %80 = vmatpush1.bf16.msra.mxu0 0
    %81 = vmatprep.subr.bf16.mxu0 0
    %82 = vmatpush1.bf16.msra.mxu0 0
    %83 = vmatprep.subr.bf16.mxu0 0
    %84 = vmatpush1.bf16.msra.mxu0 0
    %85 = vmatprep.mubr.bf16.mxu0 0
    %86 = vmatmul.mubr.bf16.gmra.mrb[0].mxu0 %v51
    %v87 = vpop.f32.mrb[0].mxu0
    %v88 = vadd.f32 0.0, %v87
    %v89 = vpop.f32.mrb[0].mxu0
    %v90 = vpop.f32.mrb[0].mxu0
    %v91 = vadd.f32 0.0, %v90
    %v92 = vpop.f32.mrb[0].mxu0
    %93 = vdwg.mxu0
    %v96 = vunpack.c.l.b16 %v38
    %v97 = vunpack.c.l.b16 %v39
    %v98 = vpack.c.b16 %v97, %v96
    %100 = vmatprep.subr.bf16.mxu0 0
    %101 = vmatpush1.bf16.msra.mxu0 %v98
    %102 = vmatprep.subr.bf16.mxu0 0
    %103 = vmatpush1.bf16.msra.mxu0 0
    %104 = vmatprep.subr.bf16.mxu0 0
    %105 = vmatpush1.bf16.msra.mxu0 0
    %106 = vmatprep.subr.bf16.mxu0 0
    %107 = vmatpush1.bf16.msra.mxu0 0
    %108 = vmatprep.subr.bf16.mxu0 0
    %109 = vmatpush1.bf16.msra.mxu0 0
    %110 = vmatprep.subr.bf16.mxu0 0
    %111 = vmatpush1.bf16.msra.mxu0 0
    %112 = vmatprep.subr.bf16.mxu0 0
    %113 = vmatpush1.bf16.msra.mxu0 0
    %114 = vmatprep.subr.bf16.mxu0 0
    %115 = vmatpush1.bf16.msra.mxu0 0
    %116 = vmatprep.subr.bf16.mxu0 0
    %117 = vmatpush1.bf16.msra.mxu0 0
    %118 = vmatprep.subr.bf16.mxu0 0
    %119 = vmatpush1.bf16.msra.mxu0 0
    %120 = vmatprep.subr.bf16.mxu0 0
    %121 = vmatpush1.bf16.msra.mxu0 0
    %122 = vmatprep.subr.bf16.mxu0 0
    %123 = vmatpush1.bf16.msra.mxu0 0
    %124 = vmatprep.subr.bf16.mxu0 0
    %125 = vmatpush1.bf16.msra.mxu0 0
    %126 = vmatprep.subr.bf16.mxu0 0
    %127 = vmatpush1.bf16.msra.mxu0 0
    %128 = vmatprep.subr.bf16.mxu0 0
    %129 = vmatpush1.bf16.msra.mxu0 0
    %130 = vmatprep.subr.bf16.mxu0 0
    %131 = vmatpush1.bf16.msra.mxu0 0
    %132 = vmatprep.mubr.bf16.mxu0 0
    %133 = vmatmul.mubr.bf16.gmra.mrb[0].mxu0 %v51
    %v134 = vpop.f32.mrb[0].mxu0
    %v135 = vadd.f32 %v88, %v134
    %v136 = vpop.f32.mrb[0].mxu0
    %v137 = vpop.f32.mrb[0].mxu0
    %v138 = vadd.f32 %v91, %v137
    %v139 = vpop.f32.mrb[0].mxu0
    %140 = vdwg.mxu0
    %v141 = vmul.f32 %v135, 5.656854
    %v142 = vmul.f32 %v138, 5.656854
    %vm143 = vcmask 261120
    %144 = vst.msk [vmem:[#allocation2] sm:$0xff] %vm143, %v141
    %145 = vst.msk [vmem:[#allocation2 + $0x8] sm:$0xff] %vm143, %v142
    // Predicated region
    $region10: #{tpu_custom_call.1} parent=1 // pred_check
      _
    $region11: #{tpu_custom_call.1} parent=1 // pred_check_branch
      %147 = sbr.rel (0) target = $region13
    $region12: #{tpu_custom_call.1} parent=1 // pred_region
      %s149 = ssub.s32 256, 256
      %150 = vsyncadd [#allocation3], %s149
      %s151 = sshll.u32 [#allocation2], 4
      %s152 = int_to_ptr.vmem [resolvable:$true] %s151
      %157 = dma.vmem_to_hbm [thread:$0]  %s152, 256, %s2, [#allocation3], 128, 128, 8
    $region13: #{tpu_custom_call.1} parent=1 // pred_fallthru
      _
    // Predicated region
    $region14: #{tpu_custom_call.1} parent=1 // pred_check
      _
    $region15: #{tpu_custom_call.1} parent=1 // pred_check_branch
      %159 = sbr.rel (0) target = $region17
    $region16: #{tpu_custom_call.1} parent=1 // pred_region
      %160 = dma.done [#allocation3], 256
    $region17: #{tpu_custom_call.1} parent=1 // pred_fallthru
      _
    %161 = vsyncpa [#allocation3], 1

</llo_original>
